<compile_context>
chip_gen: v5e
topology: v5e:2x2
jax: 0.10.0
libtpu: 0.0.40
codegen_flags: <defaults>
</compile_context>

<pallas_src>
import functools
import math

import jax
import jax.numpy as jnp
from jax.experimental import pallas as pl
from jax.experimental.pallas import tpu as pltpu

_LANE = 128
_SENTINEL_LOGIT = -30000.0   # finite in f16/bf16/f32; yields bce == 0 exactly


def _round_up(x, m):
    return ((x + m - 1) // m) * m


def _sublane_multiple(dtype):
    # 8 rows for 4-byte dtypes, 16 for 2-byte, 32 for 1-byte.
    return max(8, 32 // jnp.dtype(dtype).itemsize)


def _focal_loss_kernel(x_ref, t_ref, o_ref, acc_ref, *,
                       tile_rows, tiles_per_split, num_tiles,
                       rows_in_last_tile, has_replay, gamma):
    c = pl.program_id(0)   # split index ("parallel" -> per-TensorCore on v7x)
    j = pl.program_id(1)   # tile index within the split ("arbitrary")

    @pl.when(j == 0)
    def _():
        acc_ref[...] = jnp.zeros_like(acc_ref)

    x = x_ref[...].astype(jnp.float32)
    t = t_ref[...].astype(jnp.float32)

    # Numerically stable binary_cross_entropy_with_logits (reduction='none'):
    #   bce = max(x, 0) - x*t + log1p(exp(-|x|))
    bce = jnp.maximum(x, 0.0) - x * t + jnp.log1p(jnp.exp(-jnp.abs(x)))
    pt = jnp.exp(-bce)
    one_m_pt = 1.0 - pt

    # (1 - pt) ** gamma, specialized for small integer gamma (gamma=2 default).
    g = float(gamma)
    if g == 0.0:
        mod = jnp.ones_like(one_m_pt)
    elif g.is_integer() and 1.0 <= g <= 8.0:
        mod = one_m_pt
        for _ in range(int(g) - 1):
            mod = mod * one_m_pt
    else:
        mod = one_m_pt ** g

    # alpha and the 1/N mean are applied in the wrapper.
    focal = mod * bce

    def _accumulate(f):
        # Tile-aligned reshape + pure vreg-vreg adds into the (8, 128) acc.
        acc_ref[...] += f.reshape(tile_rows // 8, 8, _LANE).sum(axis=0)

    last_is_ragged = rows_in_last_tile != tile_rows   # static Python bool
    if not (last_is_ragged or has_replay):
        # Fast path: every tile is fully valid -> zero masking cost.
        _accumulate(focal)
    else:
        flat_tile = c * tiles_per_split + j
        if last_is_ragged:
            @pl.when(flat_tile == num_tiles - 1)
            def _():
                # Only the single ragged tile pays for iota/compare/select.
                rid = jax.lax.broadcasted_iota(jnp.int32, (tile_rows, _LANE), 0)
                _accumulate(jnp.where(rid < rows_in_last_tile, focal, 0.0))

            @pl.when(flat_tile < num_tiles - 1)
            def _():
                _accumulate(focal)
        else:
            @pl.when(flat_tile < num_tiles)   # skip replayed (clamped) tiles
            def _():
                _accumulate(focal)

    @pl.when(j == tiles_per_split - 1)
    def _():
        # One tiny cross-sublane reduce per split; lane-dense (1, 1, 128) out.
        o_ref[...] = jnp.sum(acc_ref[...], axis=0, keepdims=True).reshape(
            1, 1, _LANE)


def focal_loss(inputs, targets, *, gamma=2.0, alpha=0.25,
               tile_rows=None, num_splits=2, target_step_bytes=4 << 20,
               vmem_limit_bytes=None):
    """FocalLoss forward. `inputs` are logits, `targets` same shape (any dtype)."""
    assert inputs.shape == targets.shape
    total = math.prod(inputs.shape)

    # Flatten in native dtype (no f32 pre-cast; the kernel casts in VMEM).
    x_flat = jnp.reshape(inputs, (-1,))
    t_flat = jnp.reshape(targets, (-1,))

    # Lane alignment: pad only when total % 128 != 0, by < 128 elements, with
    # a finite sentinel logit so padded elements contribute exactly 0.
    rows = pl.cdiv(total, _LANE)
    lane_pad = rows * _LANE - total
    if lane_pad:
        x_flat = jnp.pad(x_flat, (0, lane_pad),
                         constant_values=_SENTINEL_LOGIT)
        t_flat = jnp.pad(t_flat, (0, lane_pad))
    x2 = jnp.reshape(x_flat, (rows, _LANE))
    t2 = jnp.reshape(t_flat, (rows, _LANE))

    # Dtype-aware tile sizing: ~target_step_bytes of combined input bytes per
    # grid step (tr ~ 4096 f32+f32, ~ 8192 bf16+bf16), respecting sublane
    # packing multiples (8/16/32).
    rmult = max(_sublane_multiple(inputs.dtype),
                _sublane_multiple(targets.dtype))
    bytes_per_row = _LANE * (jnp.dtype(inputs.dtype).itemsize
                             + jnp.dtype(targets.dtype).itemsize)
    if tile_rows is None:
        tr = (int(target_step_bytes) // bytes_per_row) // rmult * rmult
    else:
        tr = _round_up(int(tile_rows), rmult)
    tr = max(rmult, min(tr, _round_up(rows, rmult)))

    num_tiles = pl.cdiv(rows, tr)
    n_splits = max(1, min(int(num_splits), num_tiles))
    tiles_per_split = pl.cdiv(num_tiles, n_splits)
    grid_tiles = n_splits * tiles_per_split
    rows_in_last_tile = rows - (num_tiles - 1) * tr

    if grid_tiles > num_tiles:
        # Up to n_splits-1 grid cells past the end re-read the last block
        # (clamped index) and are skipped in-kernel -- no input padding needed.
        def _in_map(c, j):
            return (jnp.minimum(c * tiles_per_split + j, num_tiles - 1), 0)
    else:
        def _in_map(c, j):
            return (c * tiles_per_split + j, 0)

    kernel = functools.partial(
        _focal_loss_kernel,
        tile_rows=tr, tiles_per_split=tiles_per_split, num_tiles=num_tiles,
        rows_in_last_tile=rows_in_last_tile,
        has_replay=bool(grid_tiles > num_tiles),
        gamma=float(gamma))

    partials = pl.pallas_call(
        kernel,
        out_shape=jax.ShapeDtypeStruct((n_splits, 1, _LANE), jnp.float32),
        grid_spec=pltpu.PrefetchScalarGridSpec(
            num_scalar_prefetch=0,
            grid=(n_splits, tiles_per_split),
            in_specs=[
                pl.BlockSpec((tr, _LANE), _in_map),
                pl.BlockSpec((tr, _LANE), _in_map),
            ],
            out_specs=pl.BlockSpec((1, 1, _LANE), lambda c, j: (c, 0, 0)),
            scratch_shapes=[pltpu.VMEM((8, _LANE), jnp.float32)],
        ),
        compiler_params=pltpu.CompilerParams(
            dimension_semantics=("parallel", "arbitrary"),
            vmem_limit_bytes=vmem_limit_bytes),
    )(x2, t2)

    # Tiny final reduce of per-split lane partials; alpha & 1/N hoisted here.
    return jnp.sum(partials) * (float(alpha) / float(total))


def _reference_focal_loss(x, t, gamma=2.0, alpha=0.25):
    x = x.astype(jnp.float32)
    t = t.astype(jnp.float32)
    bce = jnp.maximum(x, 0.0) - x * t + jnp.log1p(jnp.exp(-jnp.abs(x)))
    pt = jnp.exp(-bce)
    return jnp.mean(alpha * (1.0 - pt) ** gamma * bce)


if __name__ == "__main__":
    key = jax.random.PRNGKey(0)
    k1, k2, k3, k4, k5, k6 = jax.random.split(key, 6)

    # Case 1: f32 logits + binary f32 targets, NCHW (2, 4, 16, 16). Aligned:
    # no padding, no mask, pure fast path.
    x = jax.random.normal(k1, (2, 4, 16, 16), dtype=jnp.float32)
    t = (jax.random.uniform(k2, (2, 4, 16, 16)) > 0.5).astype(jnp.float32)
    loss = jax.block_until_ready(focal_loss(x, t))
    ref = _reference_focal_loss(x, t)
    assert jnp.allclose(loss, ref, atol=1e-5, rtol=1e-5), (loss, ref)

    # Case 2: shape NOT divisible by 128 (exercises the tiny sentinel pad and
    # the pl.when-gated ragged-tile mask).
    x_odd = jax.random.normal(k3, (2, 3, 15, 17), dtype=jnp.float32)
    t_odd = (jax.random.uniform(k4, (2, 3, 15, 17)) > 0.5).astype(jnp.float32)
    loss_odd = jax.block_until_ready(focal_loss(x_odd, t_odd))
    ref_odd = _reference_focal_loss(x_odd, t_odd)
    assert jnp.allclose(loss_odd, ref_odd, atol=1e-5, rtol=1e-5), (loss_odd, ref_odd)

    # Case 3: native bf16 inputs, no wrapper pre-cast (kernel casts in VMEM).
    x_bf = x.astype(jnp.bfloat16)
    t_bf = t.astype(jnp.bfloat16)
    loss_bf = jax.block_until_ready(focal_loss(x_bf, t_bf))
    ref_bf = _reference_focal_loss(x_bf, t_bf)
    assert jnp.allclose(loss_bf, ref_bf, atol=1e-4, rtol=1e-4), (loss_bf, ref_bf)

    # Case 4: multi-tile, 2 splits, odd tile count (exercises the clamped
    # index_map replay-skip AND the ragged last tile together).
    x_big = jax.random.normal(k5, (2, 4, 5, 128), dtype=jnp.float32)
    t_big = (jax.random.uniform(k6, (2, 4, 5, 128)) > 0.5).astype(jnp.float32)
    loss_big = jax.block_until_ready(
        focal_loss(x_big, t_big, tile_rows=16, num_splits=2))
    ref_big = _reference_focal_loss(x_big, t_big)
    assert jnp.allclose(loss_big, ref_big, atol=1e-5, rtol=1e-5), (loss_big, ref_big)

    print("KERNEL_OK")
</pallas_src>

<mosaic_0001>
module attributes {stable_mosaic.version = 11 : i64} {
  func.func @_focal_loss_kernel(%arg0: i32, %arg1: i32, %arg2: memref<16x128xf32, #tpu.memory_space<vmem>>, %arg3: memref<16x128xf32, #tpu.memory_space<vmem>>, %arg4: memref<1x1x128xf32, #tpu.memory_space<vmem>>, %arg5: memref<8x128xf32, #tpu.memory_space<vmem>>) attributes {dimension_semantics = [#tpu.dimension_semantics<parallel>, #tpu.dimension_semantics<arbitrary>], iteration_bounds = array<i64: 1, 1>, scalar_prefetch = 0 : i64, scratch_operands = 1 : i64, tpu.core_type = #tpu.core_type<tc>, window_params = [{transform_indices = @transform_0, window_bounds = array<i64: 16, 128>}, {transform_indices = @transform_1, window_bounds = array<i64: 16, 128>}, {transform_indices = @transform_2, window_bounds = array<i64: 1, 1, 128>}]} {
    %c0_i32 = arith.constant 0 : i32
    %0 = arith.cmpi eq, %arg1, %c0_i32 : i32
    %1 = arith.extui %0 : i1 to i32
    %c0_i32_0 = arith.constant 0 : i32
    %2 = arith.cmpi ne, %1, %c0_i32_0 : i32
    scf.if %2 {
      %cst_14 = arith.constant 0.000000e+00 : f32
      %30 = vector.broadcast %cst_14 : f32 to vector<8x128xf32>
      %c0_15 = arith.constant 0 : index
      %c0_16 = arith.constant 0 : index
      %31 = vector.load %arg5[%c0_15, %c0_16] : memref<8x128xf32, #tpu.memory_space<vmem>>, vector<8x128xf32>
      tpu.vector_store %arg5[%c0_15, %c0_16], %30 {strides = array<i32>} : memref<8x128xf32, #tpu.memory_space<vmem>>, vector<8x128xf32>,
    } else {
    }
    %c0 = arith.constant 0 : index
    %c0_1 = arith.constant 0 : index
    %3 = vector.load %arg2[%c0, %c0_1] : memref<16x128xf32, #tpu.memory_space<vmem>>, vector<16x128xf32>
    %c0_2 = arith.constant 0 : index
    %c0_3 = arith.constant 0 : index
    %4 = vector.load %arg3[%c0_2, %c0_3] : memref<16x128xf32, #tpu.memory_space<vmem>>, vector<16x128xf32>
    %cst = arith.constant 0.000000e+00 : f32
    %5 = vector.broadcast %cst : f32 to vector<16x128xf32>
    %6 = arith.maximumf %3, %5 : vector<16x128xf32>
    %7 = arith.mulf %3, %4 : vector<16x128xf32>
    %8 = arith.subf %6, %7 : vector<16x128xf32>
    %9 = math.absf %3 : vector<16x128xf32>
    %cst_4 = arith.constant 0.000000e+00 : f32
    %10 = vector.broadcast %cst_4 : f32 to vector<16x128xf32>
    %11 = arith.subf %10, %9 : vector<16x128xf32>
    %12 = math.exp %11 : vector<16x128xf32>
    %13 = math.log1p %12 : vector<16x128xf32>
    %14 = arith.addf %8, %13 : vector<16x128xf32>
    %cst_5 = arith.constant 0.000000e+00 : f32
    %15 = vector.broadcast %cst_5 : f32 to vector<16x128xf32>
    %16 = arith.subf %15, %14 : vector<16x128xf32>
    %17 = math.exp %16 : vector<16x128xf32>
    %cst_6 = arith.constant 1.000000e+00 : f32
    %18 = vector.broadcast %cst_6 : f32 to vector<16x128xf32>
    %19 = arith.subf %18, %17 : vector<16x128xf32>
    %20 = arith.mulf %19, %19 : vector<16x128xf32>
    %21 = arith.mulf %20, %14 : vector<16x128xf32>
    %c0_7 = arith.constant 0 : index
    %c0_8 = arith.constant 0 : index
    %22 = vector.load %arg5[%c0_7, %c0_8] : memref<8x128xf32, #tpu.memory_space<vmem>>, vector<8x128xf32>
    %23 = vector.shape_cast %21 : vector<16x128xf32> to vector<2x8x128xf32>
    %cst_9 = arith.constant dense<0.000000e+00> : vector<8x128xf32>
    %24 = vector.multi_reduction <add>, %23, %cst_9 [0] : vector<2x8x128xf32> to vector<8x128xf32>
    %25 = arith.addf %22, %24 : vector<8x128xf32>
    %c0_10 = arith.constant 0 : index
    %c0_11 = arith.constant 0 : index
    %26 = vector.load %arg5[%c0_10, %c0_11] : memref<8x128xf32, #tpu.memory_space<vmem>>, vector<8x128xf32>
    tpu.vector_store %arg5[%c0_10, %c0_11], %25 {strides = array<i32>} : memref<8x128xf32, #tpu.memory_space<vmem>>, vector<8x128xf32>,
    %c0_i32_12 = arith.constant 0 : i32
    %27 = arith.cmpi eq, %arg1, %c0_i32_12 : i32
    %28 = arith.extui %27 : i1 to i32
    %c0_i32_13 = arith.constant 0 : i32
    %29 = arith.cmpi ne, %28, %c0_i32_13 : i32
    scf.if %29 {
      %c0_14 = arith.constant 0 : index
      %c0_15 = arith.constant 0 : index
      %30 = vector.load %arg5[%c0_14, %c0_15] : memref<8x128xf32, #tpu.memory_space<vmem>>, vector<8x128xf32>
      %cst_16 = arith.constant dense<0.000000e+00> : vector<128xf32>
      %31 = vector.multi_reduction <add>, %30, %cst_16 [0] : vector<8x128xf32> to vector<128xf32>
      %32 = vector.shape_cast %31 : vector<128xf32> to vector<1x128xf32>
      %33 = vector.shape_cast %32 : vector<1x128xf32> to vector<1x1x128xf32>
      %c0_17 = arith.constant 0 : index
      %c0_18 = arith.constant 0 : index
      %c0_19 = arith.constant 0 : index
      %34 = vector.load %arg4[%c0_17, %c0_18, %c0_19] : memref<1x1x128xf32, #tpu.memory_space<vmem>>, vector<1x1x128xf32>
      tpu.vector_store %arg4[%c0_17, %c0_18, %c0_19], %33 {strides = array<i32>} : memref<1x1x128xf32, #tpu.memory_space<vmem>>, vector<1x1x128xf32>,
    } else {
    }
    return
  }
  func.func @transform_0(%arg0: i32, %arg1: i32) -> (i32, i32) {
    %c1_i32 = arith.constant 1 : i32
    %0 = arith.muli %arg0, %c1_i32 : i32
    %1 = arith.addi %0, %arg1 : i32
    %c0_i32 = arith.constant 0 : i32
    %c0_i32_0 = arith.constant 0 : i32
    return %1, %c0_i32 : i32, i32
  }
  func.func @transform_1(%arg0: i32, %arg1: i32) -> (i32, i32) {
    %c1_i32 = arith.constant 1 : i32
    %0 = arith.muli %arg0, %c1_i32 : i32
    %1 = arith.addi %0, %arg1 : i32
    %c0_i32 = arith.constant 0 : i32
    %c0_i32_0 = arith.constant 0 : i32
    return %1, %c0_i32 : i32, i32
  }
  func.func @transform_2(%arg0: i32, %arg1: i32) -> (i32, i32, i32) {
    %c0_i32 = arith.constant 0 : i32
    %c0_i32_0 = arith.constant 0 : i32
    %c0_i32_1 = arith.constant 0 : i32
    return %arg0, %c0_i32, %c0_i32_0 : i32, i32, i32
  }
}

</mosaic_0001>

<llo_original>
// kernel: tpu_custom_call.1
$region0: #{tpu_custom_call.1}
  #allocation0 [shape = 'u32[]', space=smem, size = 0x4, offset = 0x4, fixed_abs, tag = 'smem constant byte address 0x4 - core index']
  #allocation1 [shape = 'u32[72,128]{1,0:T(1,128)}', space=vmem, size = 0x9000, scoped, tag = 'internal scratch']
  #allocation2 [shape = 'f32[8,128]{1,0:T(8,128)}', space=vmem, size = 0x1000, scoped, tag = 'scratch operand']
  %s0 = inlined_call_operand.hbm [shape: f32[16,128], index: 0, kind: input, shape index: {}]
  %s1 = inlined_call_operand.hbm [shape: f32[16,128], index: 1, kind: input, shape index: {}]
  %s2 = inlined_call_operand.hbm [shape: f32[1,1,128], index: 2, kind: output, shape index: {}]
  %s3 = sld [smem:[#allocation0]]
  $region34: #{tpu_custom_call.1} parent=0
    _
  %s5 = ssub.s32 1, %s3
  %s6 = scalar_select 0, %s5, %s3
  $region1: #{tpu_custom_call.1} parent=0
    #allocation3 [shape = 'u8[8192]{0}', space=vmem, size = 0x2000, scoped, tag = 'input window, operand 0, single buffered']
    #allocation4 [shape = 's32[1]{0}', space=sflag, size = 0x4, scoped, tag = 'scoped memory for tpu_custom_call.1']
    #allocation5 [shape = 's32[1]{0}', space=sflag, size = 0x4, scoped, tag = 'scoped memory for tpu_custom_call.1']
    #allocation6 [shape = 'u8[8192]{0}', space=vmem, size = 0x2000, scoped, tag = 'input window, operand 1, single buffered']
    #allocation7 [shape = 's32[1]{0}', space=sflag, size = 0x4, scoped, tag = 'scoped memory for tpu_custom_call.1']
    #allocation8 [shape = 'u8[512]{0}', space=vmem, size = 0x400, scoped, tag = 'output window, operand 0, single buffered']
    %7 = vsyncpa [#allocation4], 0
    %8 = vsyncpa [#allocation7], 0
    %9 = vsyncpa [#allocation5], 0
    // Predicated region
    $region2: #{tpu_custom_call.1} parent=1 // pred_check
      _
    $region3: #{tpu_custom_call.1} parent=1 // pred_check_branch
      %11 = sbr.rel (0) target = $region5
    $region4: #{tpu_custom_call.1} parent=1 // pred_region
      %s12 = sadd.s32 0, 0
      %s13 = smul.u32 2, %s12
      %15 = vsyncadd [#allocation4], 0
      %s16 = smul.addr %s13, 8
      %s17 = scalar_lea.hbm %s0, %s16
      %s18 = sshll.u32 %s17, 4
      %s19 = int_to_ptr.hbm [resolvable:$true] %s18
      %s20 = sshll.u32 [#allocation3], 4
      %s21 = int_to_ptr.vmem [resolvable:$true] %s20
      %26 = dma.hbm_to_vmem [thread:$0]  %s19, 256, %s21, [#allocation4], 128, 128, 8
    $region5: #{tpu_custom_call.1} parent=1 // pred_fallthru
      _
    // Predicated region
    $region6: #{tpu_custom_call.1} parent=1 // pred_check
      _
    $region7: #{tpu_custom_call.1} parent=1 // pred_check_branch
      %28 = sbr.rel (0) target = $region9
    $region8: #{tpu_custom_call.1} parent=1 // pred_region
      %s29 = sadd.s32 0, 0
      %s30 = smul.u32 2, %s29
      %32 = vsyncadd [#allocation7], 0
      %s33 = smul.addr %s30, 8
      %s34 = scalar_lea.hbm %s1, %s33
      %s35 = sshll.u32 %s34, 4
      %s36 = int_to_ptr.hbm [resolvable:$true] %s35
      %s37 = sshll.u32 [#allocation6], 4
      %s38 = int_to_ptr.vmem [resolvable:$true] %s37
      %43 = dma.hbm_to_vmem [thread:$0]  %s36, 256, %s38, [#allocation7], 128, 128, 8
    $region9: #{tpu_custom_call.1} parent=1 // pred_fallthru
      _
    // Predicated region
    $region10: #{tpu_custom_call.1} parent=1 // pred_check
      _
    $region11: #{tpu_custom_call.1} parent=1 // pred_check_branch
      %45 = sbr.rel (0) target = $region13
    $region12: #{tpu_custom_call.1} parent=1 // pred_region
      %47 = dma.done [#allocation4], 256
    $region13: #{tpu_custom_call.1} parent=1 // pred_fallthru
      _
    // Predicated region
    $region14: #{tpu_custom_call.1} parent=1 // pred_check
      _
    $region15: #{tpu_custom_call.1} parent=1 // pred_check_branch
      %49 = sbr.rel (0) target = $region17
    $region16: #{tpu_custom_call.1} parent=1 // pred_region
      %51 = dma.done [#allocation7], 256
    $region17: #{tpu_custom_call.1} parent=1 // pred_fallthru
      _
    %s52 = sadd.s32 0, 0
    %s53 = smul.u32 2, %s52
    %s54 = sadd.s32 0, 0
    %s55 = smul.u32 2, %s54
    %p56 = scmp.eq.s32.totalorder 0, 0
    // Predicated region
    $region18: #{tpu_custom_call.1} parent=1 // pred_check
      %p57 = pneg %p56
    $region19: #{tpu_custom_call.1} parent=1 // pred_check_branch
      %59 = sbr.rel (%p57) target = $region21
    $region20: #{tpu_custom_call.1} parent=1 // pred_region
      %60 = vst [vmem:[#allocation2] sm:$0xff] 0.0
    $region21: #{tpu_custom_call.1} parent=1 // pred_fallthru
      _
    %v61 = vld [vmem:[#allocation3] sm:$0xff]
    %v62 = vld [vmem:[#allocation3 + $0x8] sm:$0xff]
    %v63 = vld [vmem:[#allocation6] sm:$0xff]
    %v64 = vld [vmem:[#allocation6 + $0x8] sm:$0xff]
    %v65 = vmax.f32 %v61, 0.0
    %v66 = vmax.f32 %v62, 0.0
    %v67 = vmul.f32 %v61, %v63
    %v68 = vmul.f32 %v62, %v64
    %v69 = vsub.f32 %v65, %v67
    %v70 = vsub.f32 %v66, %v68
    %v71 = vand.u32 2147483647, %v61
    %v72 = vand.u32 2147483647, %v62
    %v73 = vsub.f32 0.0, %v71
    %v74 = vsub.f32 0.0, %v72
    %v75 = vmul.f32 %v73, 1.442695
    %v76 = vpow.pop %v75
    %v77 = vmul.f32 %v74, 1.442695
    %v78 = vpow.pop %v77
    %v79 = vadd.f32 %v76, 1.0
    %v80 = vlog2.pop %v79
    %v81 = vmul.f32 %v80, 0.6931472
    %v82 = vmul.f32 -0.5, %v76
    %v83 = vadd.f32 %v82, 1.0
    %v84 = vmul.f32 %v83, %v76
    %v85 = vand.u32 2147483647, %v76
    %vm86 = vcmp.lt.f32.partialorder %v85, 0.0004427343
    %v87 = vsel %vm86, %v84, %v81
    %v88 = vadd.f32 %v78, 1.0
    %v89 = vlog2.pop %v88
    %v90 = vmul.f32 %v89, 0.6931472
    %v91 = vmul.f32 -0.5, %v78
    %v92 = vadd.f32 %v91, 1.0
    %v93 = vmul.f32 %v92, %v78
    %v94 = vand.u32 2147483647, %v78
    %vm95 = vcmp.lt.f32.partialorder %v94, 0.0004427343
    %v96 = vsel %vm95, %v93, %v90
    %v97 = vadd.f32 %v69, %v87
    %v98 = vadd.f32 %v70, %v96
    %v99 = vsub.f32 0.0, %v97
    %v100 = vsub.f32 0.0, %v98
    %v101 = vmul.f32 %v99, 1.442695
    %v102 = vpow.pop %v101
    %v103 = vmul.f32 %v100, 1.442695
    %v104 = vpow.pop %v103
    %v105 = vsub.f32 1.0, %v102
    %v106 = vsub.f32 1.0, %v104
    %v107 = vmul.f32 %v105, %v105
    %v108 = vmul.f32 %v106, %v106
    %v109 = vmul.f32 %v107, %v97
    %v110 = vmul.f32 %v108, %v98
    %v111 = vld [vmem:[#allocation2] sm:$0xff]
    %v112 = vadd.f32 %v109, %v110
    %v113 = vadd.f32 %v111, %v112
    %114 = vst [vmem:[#allocation2] sm:$0xff] %v113
    // Predicated region
    $region22: #{tpu_custom_call.1} parent=1 // pred_check
      %p115 = pneg %p56
    $region23: #{tpu_custom_call.1} parent=1 // pred_check_branch
      %117 = sbr.rel (%p115) target = $region25
    $region24: #{tpu_custom_call.1} parent=1 // pred_region
      %v118 = vld [vmem:[#allocation2] sm:$0xff]
      %v119 = vrot.slane %v118, 4
      %v120 = vadd.f32 %v118, %v119
      %v121 = vrot.slane %v120, 2
      %v122 = vadd.f32 %v120, %v121
      %v123 = vrot.slane %v122, 1
      %v124 = vadd.f32 %v122, %v123
      %125 = vst [vmem:[#allocation8] sm:$0x1] %v124
    $region25: #{tpu_custom_call.1} parent=1 // pred_fallthru
      _
    // Predicated region
    $region26: #{tpu_custom_call.1} parent=1 // pred_check
      _
    $region27: #{tpu_custom_call.1} parent=1 // pred_check_branch
      %127 = sbr.rel (0) target = $region29
    $region28: #{tpu_custom_call.1} parent=1 // pred_region
      %129 = vsyncadd [#allocation5], 0
      %s131 = sshll.u32 [#allocation8], 4
      %s132 = int_to_ptr.vmem [resolvable:$true] %s131
      %s133 = sshll.u32 %s2, 4
      %s134 = int_to_ptr.hbm [resolvable:$true] %s133
      %136 = dma.vmem_to_hbm [thread:$0]  %s132, 16, %s134, [#allocation5]
    $region29: #{tpu_custom_call.1} parent=1 // pred_fallthru
      _
    // Predicated region
    $region30: #{tpu_custom_call.1} parent=1 // pred_check
      _
    $region31: #{tpu_custom_call.1} parent=1 // pred_check_branch
      %138 = sbr.rel (0) target = $region33
    $region32: #{tpu_custom_call.1} parent=1 // pred_region
      %140 = dma.done [#allocation5], 16
    $region33: #{tpu_custom_call.1} parent=1 // pred_fallthru
      _
    %141 = vsyncpa [#allocation4], 1
    %142 = vsyncpa [#allocation7], 1
    %143 = vsyncpa [#allocation5], 1

</llo_original>
